<compile_context>
chip_gen: v7x
topology: tpu7x:2x2x1
jax: 0.10.0
libtpu: 0.0.40
codegen_flags: <defaults>
</compile_context>

<pallas_src>
import math

import jax
import jax.numpy as jnp
from jax import lax
from jax.experimental import pallas as pl
from jax.experimental.pallas import tpu as pltpu

# Hyper-parameters (small, consistent with the module signature).
N_HEADS = 2
D_K = 8
D_V = 8
D_MODEL = 32
D_FF = 64
EPS = 1e-5  # PyTorch nn.LayerNorm default


def _layer_norm(x):
    # LayerNorm over the last axis with unit gamma / zero beta.
    mu = jnp.mean(x, axis=-1, keepdims=True)
    var = jnp.mean((x - mu) * (x - mu), axis=-1, keepdims=True)
    return (x - mu) * lax.rsqrt(var + EPS)


def encoder_layer_kernel(x_ref, mask_ref, wqkv_ref, w1_ref, w2_ref,
                         out_ref, attn_ref):
    """One grid step == one block of `Bblk` batch elements, fully VMEM resident.

    x_ref:    [Bblk*S, D_MODEL]               flattened activations
    mask_ref: [Bblk, S, S]                    1.0 == masked key position
    wqkv_ref: [D_MODEL, 2*H*D_K + H*D_MODEL]  fused (Wq/sqrt(d_k) | Wk | Wv_h @ Wo_h)
    w1_ref:   [D_MODEL, D_FF]
    w2_ref:   [D_FF, D_MODEL]
    out_ref:  [Bblk*S, D_MODEL]
    attn_ref: [Bblk*H*S, S]                   lane-dense attn slab (reshaped by wrapper)
    """
    Bblk = mask_ref.shape[0]
    S = mask_ref.shape[1]

    x2d = x_ref[...]  # [Bblk*S, D_MODEL]

    # Single fused projection (one MXU pass). The V columns already carry Wo folded in,
    # so per-head context contributions land directly in model space; 1/sqrt(d_k) is
    # already folded into the Q columns.
    qkv = jnp.dot(x2d, wqkv_ref[...], preferred_element_type=jnp.float32)

    k_off = N_HEADS * D_K
    v_off = 2 * N_HEADS * D_K
    # Contract the last dim of q with the last dim of k (avoids an explicit k.T).
    dn = (((1,), (1,)), ((), ()))

    rows = []
    for b in range(Bblk):  # tiny static loops (Bblk<=2, H=2)
        r0, r1 = b * S, (b + 1) * S
        # Head-invariant additive mask bias, computed once per batch element.
        bias = jnp.where(mask_ref[b] > 0.5, -1e9, 0.0)  # [S, S]
        acc = None
        for h in range(N_HEADS):
            q = qkv[r0:r1, h * D_K:(h + 1) * D_K]                            # [S, D_K]
            k = qkv[r0:r1, k_off + h * D_K:k_off + (h + 1) * D_K]            # [S, D_K]
            vp = qkv[r0:r1, v_off + h * D_MODEL:v_off + (h + 1) * D_MODEL]   # [S, D_MODEL]

            scores = lax.dot_general(q, k, dn, preferred_element_type=jnp.float32)
            scores = scores + bias  # masked_fill as additive bias (scale already in Wq)

            # Numerically-stable softmax with exact normalization (attn rows sum to 1).
            m = jnp.max(scores, axis=-1, keepdims=True)
            e = jnp.exp(scores - m)
            p = e / jnp.sum(e, axis=-1, keepdims=True)                       # [S, S]

            # Lane-dense 2D attn slab: one contiguous [S, S] tile per (b, h).
            a0 = (b * N_HEADS + h) * S
            attn_ref[a0:a0 + S, :] = p

            # Per-head context already in model space (Wo folded into vp): accumulate.
            ctx_h = jnp.dot(p, vp, preferred_element_type=jnp.float32)       # [S, D_MODEL]
            acc = ctx_h if acc is None else acc + ctx_h
        rows.append(acc)

    attn_out = jnp.concatenate(rows, axis=0) if Bblk > 1 else rows[0]  # [Bblk*S, D_MODEL]

    # Residual + LayerNorm after attention.
    y1 = _layer_norm(attn_out + x2d)

    # Position-wise feed-forward + residual + LayerNorm (runs once over all sublanes).
    hidden = jnp.maximum(
        jnp.dot(y1, w1_ref[...], preferred_element_type=jnp.float32), 0.0)
    ff = jnp.dot(hidden, w2_ref[...], preferred_element_type=jnp.float32)
    out_ref[...] = _layer_norm(ff + y1)


def encoder_layer(x, mask, params, *, batch_block=None):
    """x: [B, S, D_MODEL] f32; mask: [B, S, S] f32 (1.0 == masked).

    batch_block: batch elements per grid step.  Defaults to B (one VMEM-resident block,
    best at tiny sizes).  For large B, pass a divisor of B so the 'parallel' grid axis
    can shard blocks across TensorCores (v7x) and amortize launch overhead.
    """
    B, S, _ = x.shape
    wq, wk, wv, wo, w1, w2 = params

    if batch_block is None:
        batch_block = B
    assert B % batch_block == 0
    n_blocks = B // batch_block

    # One-time weight transforms (not per-token activation pre-scaling):
    #   * fold 1/sqrt(d_k) into Wq,
    #   * fold Wo into each head's V projection: wvo_h = wv_h @ wo_h.
    wq_scaled = wq * (1.0 / math.sqrt(D_K))
    wvo = jnp.concatenate(
        [wv[:, h * D_V:(h + 1) * D_V] @ wo[h * D_V:(h + 1) * D_V, :]
         for h in range(N_HEADS)],
        axis=1)                                             # [D_MODEL, H*D_MODEL]
    wqkv = jnp.concatenate([wq_scaled, wk, wvo], axis=1)    # [D_MODEL, 2*H*D_K + H*D_MODEL]

    x2d = x.reshape(B * S, D_MODEL)

    def blocked(shape):
        nd = len(shape)
        return pl.BlockSpec(shape, lambda i, nd=nd: (i,) + (0,) * (nd - 1))

    def full(shape):
        nd = len(shape)
        return pl.BlockSpec(shape, lambda i, nd=nd: (0,) * nd)

    out_shape = (
        jax.ShapeDtypeStruct((B * S, D_MODEL), jnp.float32),
        jax.ShapeDtypeStruct((B * N_HEADS * S, S), jnp.float32),
    )

    out2d, attn2d = pl.pallas_call(
        encoder_layer_kernel,
        out_shape=out_shape,
        grid_spec=pltpu.PrefetchScalarGridSpec(
            num_scalar_prefetch=0,
            grid=(n_blocks,),
            in_specs=[
                blocked((batch_block * S, D_MODEL)),          # x
                blocked((batch_block, S, S)),                 # mask
                full(wqkv.shape),                             # fused QKV' weight
                full(w1.shape),                               # FFN in
                full(w2.shape),                               # FFN out
            ],
            out_specs=(
                blocked((batch_block * S, D_MODEL)),          # enc_outputs
                blocked((batch_block * N_HEADS * S, S)),      # attn (lane-dense 2D slab)
            ),
        ),
        compiler_params=pltpu.CompilerParams(dimension_semantics=("parallel",)),
    )(x2d, mask, wqkv, w1, w2)

    return out2d.reshape(B, S, D_MODEL), attn2d.reshape(B, N_HEADS, S, S)


def reference(x, mask, params):
    """Pure-JAX reference matching the PyTorch module."""
    wq, wk, wv, wo, w1, w2 = params
    B, S, _ = x.shape
    q = (x @ wq).reshape(B, S, N_HEADS, D_K).transpose(0, 2, 1, 3)
    k = (x @ wk).reshape(B, S, N_HEADS, D_K).transpose(0, 2, 1, 3)
    v = (x @ wv).reshape(B, S, N_HEADS, D_V).transpose(0, 2, 1, 3)
    scores = jnp.einsum('bhqd,bhkd->bhqk', q, k) / math.sqrt(D_K)
    scores = jnp.where(mask[:, None] > 0.5, -1e9, scores)
    attn = jax.nn.softmax(scores, axis=-1)
    ctx = jnp.einsum('bhqk,bhkd->bhqd', attn, v)
    ctx = ctx.transpose(0, 2, 1, 3).reshape(B, S, N_HEADS * D_V)

    def ln(t):
        mu = t.mean(-1, keepdims=True)
        var = ((t - mu) ** 2).mean(-1, keepdims=True)
        return (t - mu) / jnp.sqrt(var + EPS)

    y1 = ln(ctx @ wo + x)
    ff = jnp.maximum(y1 @ w1, 0.0) @ w2
    y2 = ln(ff + y1)
    return y2, attn


if __name__ == "__main__":
    B, S = 2, 8
    key = jax.random.PRNGKey(0)
    kx, kq, kk, kv, ko, k1, k2 = jax.random.split(key, 7)

    x = jax.random.normal(kx, (B, S, D_MODEL), dtype=jnp.float32)

    # Padding-style self-attention mask: last positions of each sequence are masked keys.
    valid_len = jnp.array([S, S - 2], dtype=jnp.int32)  # per-batch valid lengths
    key_ids = jnp.arange(S)[None, None, :]              # [1, 1, S]
    mask = (key_ids >= valid_len[:, None, None]).astype(jnp.float32)
    mask = jnp.broadcast_to(mask, (B, S, S))            # [B, S, S]

    # Deterministic parameter init (weights stored [in, out]).
    params = (
        0.1 * jax.random.normal(kq, (D_MODEL, N_HEADS * D_K), dtype=jnp.float32),
        0.1 * jax.random.normal(kk, (D_MODEL, N_HEADS * D_K), dtype=jnp.float32),
        0.1 * jax.random.normal(kv, (D_MODEL, N_HEADS * D_V), dtype=jnp.float32),
        0.1 * jax.random.normal(ko, (N_HEADS * D_V, D_MODEL), dtype=jnp.float32),
        0.1 * jax.random.normal(k1, (D_MODEL, D_FF), dtype=jnp.float32),
        0.1 * jax.random.normal(k2, (D_FF, D_MODEL), dtype=jnp.float32),
    )

    out, attn = encoder_layer(x, mask, params)
    jax.block_until_ready((out, attn))

    ref_out, ref_attn = reference(x, mask, params)
    assert out.shape == (B, S, D_MODEL) and attn.shape == (B, N_HEADS, S, S)
    # Only deviation from the reference is f32 reassociation from folding Wo into the
    # per-head V projection and 1/sqrt(d_k) into Wq; softmax normalization is exact.
    assert jnp.allclose(out, ref_out, atol=1e-3, rtol=1e-3)
    assert jnp.allclose(attn, ref_attn, atol=1e-3, rtol=1e-3)

    print("KERNEL_OK")
</pallas_src>

<mosaic_0001>
module attributes {stable_mosaic.version = 11 : i64} {
  func.func @encoder_layer_kernel(%arg0: i32, %arg1: memref<16x32xf32, #tpu.memory_space<vmem>>, %arg2: memref<2x8x8xf32, #tpu.memory_space<vmem>>, %arg3: memref<32x96xf32, #tpu.memory_space<vmem>>, %arg4: memref<32x64xf32, #tpu.memory_space<vmem>>, %arg5: memref<64x32xf32, #tpu.memory_space<vmem>>, %arg6: memref<16x32xf32, #tpu.memory_space<vmem>>, %arg7: memref<32x8xf32, #tpu.memory_space<vmem>>) attributes {dimension_semantics = [#tpu.dimension_semantics<parallel>], iteration_bounds = array<i64: 1>, scalar_prefetch = 0 : i64, scratch_operands = 0 : i64, tpu.core_type = #tpu.core_type<tc>, window_params = [{transform_indices = @transform_0, window_bounds = array<i64: 16, 32>}, {transform_indices = @transform_1, window_bounds = array<i64: 2, 8, 8>}, {pipeline_mode = #tpu.pipeline_mode<synchronous>, transform_indices = @transform_2, window_bounds = array<i64: 32, 96>}, {pipeline_mode = #tpu.pipeline_mode<synchronous>, transform_indices = @transform_3, window_bounds = array<i64: 32, 64>}, {pipeline_mode = #tpu.pipeline_mode<synchronous>, transform_indices = @transform_4, window_bounds = array<i64: 64, 32>}, {transform_indices = @transform_5, window_bounds = array<i64: 16, 32>}, {transform_indices = @transform_6, window_bounds = array<i64: 32, 8>}]} {
    %c0 = arith.constant 0 : index
    %c0_0 = arith.constant 0 : index
    %0 = vector.load %arg1[%c0, %c0_0] : memref<16x32xf32, #tpu.memory_space<vmem>>, vector<16x32xf32>
    %c0_1 = arith.constant 0 : index
    %c0_2 = arith.constant 0 : index
    %1 = vector.load %arg3[%c0_1, %c0_2] : memref<32x96xf32, #tpu.memory_space<vmem>>, vector<32x96xf32>
    %cst = arith.constant dense<0.000000e+00> : vector<16x96xf32>
    %2 = tpu.matmul %0, %1, %cst {dimension_numbers = #tpu.dot_dimension_numbers<[1], [0], [0], [1], [0, 0, 1, 1], [], []>} : vector<16x32xf32>, vector<32x96xf32>, vector<16x96xf32> -> vector<16x96xf32>
    %c0_3 = arith.constant 0 : index
    %c0_4 = arith.constant 0 : index
    %c0_5 = arith.constant 0 : index
    %3 = vector.load %arg2[%c0_3, %c0_4, %c0_5] : memref<2x8x8xf32, #tpu.memory_space<vmem>>, vector<1x8x8xf32>
    %4 = vector.shape_cast %3 : vector<1x8x8xf32> to vector<8x8xf32>
    %cst_6 = arith.constant 5.000000e-01 : f32
    %5 = vector.broadcast %cst_6 : f32 to vector<8x8xf32>
    %6 = arith.cmpf ogt, %4, %5 : vector<8x8xf32>
    %cst_7 = arith.constant -1.000000e+09 : f32
    %cst_8 = arith.constant 0.000000e+00 : f32
    %7 = vector.broadcast %cst_7 : f32 to vector<8x8xf32>
    %8 = vector.broadcast %cst_8 : f32 to vector<8x8xf32>
    %9 = arith.select %6, %7, %8 : vector<8x8xi1>, vector<8x8xf32>
    %10 = vector.extract_strided_slice %2 {offsets = [0, 0], sizes = [8, 8], strides = [1, 1]} : vector<16x96xf32> to vector<8x8xf32>
    %11 = vector.extract_strided_slice %2 {offsets = [0, 16], sizes = [8, 8], strides = [1, 1]} : vector<16x96xf32> to vector<8x8xf32>
    %12 = vector.extract_strided_slice %2 {offsets = [0, 32], sizes = [8, 32], strides = [1, 1]} : vector<16x96xf32> to vector<8x32xf32>
    %cst_9 = arith.constant dense<0.000000e+00> : vector<8x8xf32>
    %13 = tpu.matmul %10, %11, %cst_9 {dimension_numbers = #tpu.dot_dimension_numbers<[1], [1], [0], [0], [0, 0, 1, 0], [], []>} : vector<8x8xf32>, vector<8x8xf32>, vector<8x8xf32> -> vector<8x8xf32>
    %14 = arith.addf %13, %9 : vector<8x8xf32>
    %cst_10 = arith.constant dense<0xFF800000> : vector<8xf32>
    %15 = vector.multi_reduction <maximumf>, %14, %cst_10 [1] : vector<8x8xf32> to vector<8xf32>
    %16 = vector.shape_cast %15 : vector<8xf32> to vector<8x1xf32>
    %17 = vector.broadcast %16 : vector<8x1xf32> to vector<8x8xf32>
    %18 = arith.subf %14, %17 : vector<8x8xf32>
    %19 = math.exp %18 : vector<8x8xf32>
    %cst_11 = arith.constant dense<0.000000e+00> : vector<8xf32>
    %20 = vector.multi_reduction <add>, %19, %cst_11 [1] : vector<8x8xf32> to vector<8xf32>
    %21 = vector.shape_cast %20 : vector<8xf32> to vector<8x1xf32>
    %22 = vector.broadcast %21 : vector<8x1xf32> to vector<8x8xf32>
    %23 = arith.divf %19, %22 : vector<8x8xf32>
    %c0_12 = arith.constant 0 : index
    %c0_13 = arith.constant 0 : index
    %24 = vector.load %arg7[%c0_12, %c0_13] : memref<32x8xf32, #tpu.memory_space<vmem>>, vector<8x8xf32>
    tpu.vector_store %arg7[%c0_12, %c0_13], %23 {strides = array<i32>} : memref<32x8xf32, #tpu.memory_space<vmem>>, vector<8x8xf32>,
    %cst_14 = arith.constant dense<0.000000e+00> : vector<8x32xf32>
    %25 = tpu.matmul %23, %12, %cst_14 {dimension_numbers = #tpu.dot_dimension_numbers<[1], [0], [0], [1], [0, 0, 1, 1], [], []>} : vector<8x8xf32>, vector<8x32xf32>, vector<8x32xf32> -> vector<8x32xf32>
    %26 = vector.extract_strided_slice %2 {offsets = [0, 8], sizes = [8, 8], strides = [1, 1]} : vector<16x96xf32> to vector<8x8xf32>
    %27 = vector.extract_strided_slice %2 {offsets = [0, 24], sizes = [8, 8], strides = [1, 1]} : vector<16x96xf32> to vector<8x8xf32>
    %28 = vector.extract_strided_slice %2 {offsets = [0, 64], sizes = [8, 32], strides = [1, 1]} : vector<16x96xf32> to vector<8x32xf32>
    %cst_15 = arith.constant dense<0.000000e+00> : vector<8x8xf32>
    %29 = tpu.matmul %26, %27, %cst_15 {dimension_numbers = #tpu.dot_dimension_numbers<[1], [1], [0], [0], [0, 0, 1, 0], [], []>} : vector<8x8xf32>, vector<8x8xf32>, vector<8x8xf32> -> vector<8x8xf32>
    %30 = arith.addf %29, %9 : vector<8x8xf32>
    %cst_16 = arith.constant dense<0xFF800000> : vector<8xf32>
    %31 = vector.multi_reduction <maximumf>, %30, %cst_16 [1] : vector<8x8xf32> to vector<8xf32>
    %32 = vector.shape_cast %31 : vector<8xf32> to vector<8x1xf32>
    %33 = vector.broadcast %32 : vector<8x1xf32> to vector<8x8xf32>
    %34 = arith.subf %30, %33 : vector<8x8xf32>
    %35 = math.exp %34 : vector<8x8xf32>
    %cst_17 = arith.constant dense<0.000000e+00> : vector<8xf32>
    %36 = vector.multi_reduction <add>, %35, %cst_17 [1] : vector<8x8xf32> to vector<8xf32>
    %37 = vector.shape_cast %36 : vector<8xf32> to vector<8x1xf32>
    %38 = vector.broadcast %37 : vector<8x1xf32> to vector<8x8xf32>
    %39 = arith.divf %35, %38 : vector<8x8xf32>
    %c8 = arith.constant 8 : index
    %c0_18 = arith.constant 0 : index
    %40 = vector.load %arg7[%c8, %c0_18] : memref<32x8xf32, #tpu.memory_space<vmem>>, vector<8x8xf32>
    tpu.vector_store %arg7[%c8, %c0_18], %39 {strides = array<i32>} : memref<32x8xf32, #tpu.memory_space<vmem>>, vector<8x8xf32>,
    %cst_19 = arith.constant dense<0.000000e+00> : vector<8x32xf32>
    %41 = tpu.matmul %39, %28, %cst_19 {dimension_numbers = #tpu.dot_dimension_numbers<[1], [0], [0], [1], [0, 0, 1, 1], [], []>} : vector<8x8xf32>, vector<8x32xf32>, vector<8x32xf32> -> vector<8x32xf32>
    %42 = arith.addf %25, %41 : vector<8x32xf32>
    %c1 = arith.constant 1 : index
    %c0_20 = arith.constant 0 : index
    %c0_21 = arith.constant 0 : index
    %43 = vector.load %arg2[%c1, %c0_20, %c0_21] : memref<2x8x8xf32, #tpu.memory_space<vmem>>, vector<1x8x8xf32>
    %44 = vector.shape_cast %43 : vector<1x8x8xf32> to vector<8x8xf32>
    %cst_22 = arith.constant 5.000000e-01 : f32
    %45 = vector.broadcast %cst_22 : f32 to vector<8x8xf32>
    %46 = arith.cmpf ogt, %44, %45 : vector<8x8xf32>
    %cst_23 = arith.constant -1.000000e+09 : f32
    %cst_24 = arith.constant 0.000000e+00 : f32
    %47 = vector.broadcast %cst_23 : f32 to vector<8x8xf32>
    %48 = vector.broadcast %cst_24 : f32 to vector<8x8xf32>
    %49 = arith.select %46, %47, %48 : vector<8x8xi1>, vector<8x8xf32>
    %50 = vector.extract_strided_slice %2 {offsets = [8, 0], sizes = [8, 8], strides = [1, 1]} : vector<16x96xf32> to vector<8x8xf32>
    %51 = vector.extract_strided_slice %2 {offsets = [8, 16], sizes = [8, 8], strides = [1, 1]} : vector<16x96xf32> to vector<8x8xf32>
    %52 = vector.extract_strided_slice %2 {offsets = [8, 32], sizes = [8, 32], strides = [1, 1]} : vector<16x96xf32> to vector<8x32xf32>
    %cst_25 = arith.constant dense<0.000000e+00> : vector<8x8xf32>
    %53 = tpu.matmul %50, %51, %cst_25 {dimension_numbers = #tpu.dot_dimension_numbers<[1], [1], [0], [0], [0, 0, 1, 0], [], []>} : vector<8x8xf32>, vector<8x8xf32>, vector<8x8xf32> -> vector<8x8xf32>
    %54 = arith.addf %53, %49 : vector<8x8xf32>
    %cst_26 = arith.constant dense<0xFF800000> : vector<8xf32>
    %55 = vector.multi_reduction <maximumf>, %54, %cst_26 [1] : vector<8x8xf32> to vector<8xf32>
    %56 = vector.shape_cast %55 : vector<8xf32> to vector<8x1xf32>
    %57 = vector.broadcast %56 : vector<8x1xf32> to vector<8x8xf32>
    %58 = arith.subf %54, %57 : vector<8x8xf32>
    %59 = math.exp %58 : vector<8x8xf32>
    %cst_27 = arith.constant dense<0.000000e+00> : vector<8xf32>
    %60 = vector.multi_reduction <add>, %59, %cst_27 [1] : vector<8x8xf32> to vector<8xf32>
    %61 = vector.shape_cast %60 : vector<8xf32> to vector<8x1xf32>
    %62 = vector.broadcast %61 : vector<8x1xf32> to vector<8x8xf32>
    %63 = arith.divf %59, %62 : vector<8x8xf32>
    %c16 = arith.constant 16 : index
    %c0_28 = arith.constant 0 : index
    %64 = vector.load %arg7[%c16, %c0_28] : memref<32x8xf32, #tpu.memory_space<vmem>>, vector<8x8xf32>
    tpu.vector_store %arg7[%c16, %c0_28], %63 {strides = array<i32>} : memref<32x8xf32, #tpu.memory_space<vmem>>, vector<8x8xf32>,
    %cst_29 = arith.constant dense<0.000000e+00> : vector<8x32xf32>
    %65 = tpu.matmul %63, %52, %cst_29 {dimension_numbers = #tpu.dot_dimension_numbers<[1], [0], [0], [1], [0, 0, 1, 1], [], []>} : vector<8x8xf32>, vector<8x32xf32>, vector<8x32xf32> -> vector<8x32xf32>
    %66 = vector.extract_strided_slice %2 {offsets = [8, 8], sizes = [8, 8], strides = [1, 1]} : vector<16x96xf32> to vector<8x8xf32>
    %67 = vector.extract_strided_slice %2 {offsets = [8, 24], sizes = [8, 8], strides = [1, 1]} : vector<16x96xf32> to vector<8x8xf32>
    %68 = vector.extract_strided_slice %2 {offsets = [8, 64], sizes = [8, 32], strides = [1, 1]} : vector<16x96xf32> to vector<8x32xf32>
    %cst_30 = arith.constant dense<0.000000e+00> : vector<8x8xf32>
    %69 = tpu.matmul %66, %67, %cst_30 {dimension_numbers = #tpu.dot_dimension_numbers<[1], [1], [0], [0], [0, 0, 1, 0], [], []>} : vector<8x8xf32>, vector<8x8xf32>, vector<8x8xf32> -> vector<8x8xf32>
    %70 = arith.addf %69, %49 : vector<8x8xf32>
    %cst_31 = arith.constant dense<0xFF800000> : vector<8xf32>
    %71 = vector.multi_reduction <maximumf>, %70, %cst_31 [1] : vector<8x8xf32> to vector<8xf32>
    %72 = vector.shape_cast %71 : vector<8xf32> to vector<8x1xf32>
    %73 = vector.broadcast %72 : vector<8x1xf32> to vector<8x8xf32>
    %74 = arith.subf %70, %73 : vector<8x8xf32>
    %75 = math.exp %74 : vector<8x8xf32>
    %cst_32 = arith.constant dense<0.000000e+00> : vector<8xf32>
    %76 = vector.multi_reduction <add>, %75, %cst_32 [1] : vector<8x8xf32> to vector<8xf32>
    %77 = vector.shape_cast %76 : vector<8xf32> to vector<8x1xf32>
    %78 = vector.broadcast %77 : vector<8x1xf32> to vector<8x8xf32>
    %79 = arith.divf %75, %78 : vector<8x8xf32>
    %c24 = arith.constant 24 : index
    %c0_33 = arith.constant 0 : index
    %80 = vector.load %arg7[%c24, %c0_33] : memref<32x8xf32, #tpu.memory_space<vmem>>, vector<8x8xf32>
    tpu.vector_store %arg7[%c24, %c0_33], %79 {strides = array<i32>} : memref<32x8xf32, #tpu.memory_space<vmem>>, vector<8x8xf32>,
    %cst_34 = arith.constant dense<0.000000e+00> : vector<8x32xf32>
    %81 = tpu.matmul %79, %68, %cst_34 {dimension_numbers = #tpu.dot_dimension_numbers<[1], [0], [0], [1], [0, 0, 1, 1], [], []>} : vector<8x8xf32>, vector<8x32xf32>, vector<8x32xf32> -> vector<8x32xf32>
    %82 = arith.addf %65, %81 : vector<8x32xf32>
    %83 = tpu.concatenate %42, %82 in 0 : vector<8x32xf32>, vector<8x32xf32> -> vector<16x32xf32>
    %84 = arith.addf %83, %0 : vector<16x32xf32>
    %cst_35 = arith.constant dense<0.000000e+00> : vector<16xf32>
    %85 = vector.multi_reduction <add>, %84, %cst_35 [1] : vector<16x32xf32> to vector<16xf32>
    %86 = vector.shape_cast %85 : vector<16xf32> to vector<16x1xf32>
    %cst_36 = arith.constant 3.200000e+01 : f32
    %87 = vector.broadcast %cst_36 : f32 to vector<16x1xf32>
    %88 = arith.divf %86, %87 : vector<16x1xf32>
    %89 = vector.broadcast %88 : vector<16x1xf32> to vector<16x32xf32>
    %90 = arith.subf %84, %89 : vector<16x32xf32>
    %91 = vector.broadcast %88 : vector<16x1xf32> to vector<16x32xf32>
    %92 = arith.subf %84, %91 : vector<16x32xf32>
    %93 = arith.mulf %90, %92 : vector<16x32xf32>
    %cst_37 = arith.constant dense<0.000000e+00> : vector<16xf32>
    %94 = vector.multi_reduction <add>, %93, %cst_37 [1] : vector<16x32xf32> to vector<16xf32>
    %95 = vector.shape_cast %94 : vector<16xf32> to vector<16x1xf32>
    %cst_38 = arith.constant 3.200000e+01 : f32
    %96 = vector.broadcast %cst_38 : f32 to vector<16x1xf32>
    %97 = arith.divf %95, %96 : vector<16x1xf32>
    %98 = vector.broadcast %88 : vector<16x1xf32> to vector<16x32xf32>
    %99 = arith.subf %84, %98 : vector<16x32xf32>
    %cst_39 = arith.constant 9.99999974E-6 : f32
    %100 = vector.broadcast %cst_39 : f32 to vector<16x1xf32>
    %101 = arith.addf %97, %100 : vector<16x1xf32>
    %102 = math.rsqrt %101 : vector<16x1xf32>
    %103 = vector.broadcast %102 : vector<16x1xf32> to vector<16x32xf32>
    %104 = arith.mulf %99, %103 : vector<16x32xf32>
    %c0_40 = arith.constant 0 : index
    %c0_41 = arith.constant 0 : index
    %105 = vector.load %arg4[%c0_40, %c0_41] : memref<32x64xf32, #tpu.memory_space<vmem>>, vector<32x64xf32>
    %cst_42 = arith.constant dense<0.000000e+00> : vector<16x64xf32>
    %106 = tpu.matmul %104, %105, %cst_42 {dimension_numbers = #tpu.dot_dimension_numbers<[1], [0], [0], [1], [0, 0, 1, 1], [], []>} : vector<16x32xf32>, vector<32x64xf32>, vector<16x64xf32> -> vector<16x64xf32>
    %cst_43 = arith.constant 0.000000e+00 : f32
    %107 = vector.broadcast %cst_43 : f32 to vector<16x64xf32>
    %108 = arith.maximumf %106, %107 : vector<16x64xf32>
    %c0_44 = arith.constant 0 : index
    %c0_45 = arith.constant 0 : index
    %109 = vector.load %arg5[%c0_44, %c0_45] : memref<64x32xf32, #tpu.memory_space<vmem>>, vector<64x32xf32>
    %cst_46 = arith.constant dense<0.000000e+00> : vector<16x32xf32>
    %110 = tpu.matmul %108, %109, %cst_46 {dimension_numbers = #tpu.dot_dimension_numbers<[1], [0], [0], [1], [0, 0, 1, 1], [], []>} : vector<16x64xf32>, vector<64x32xf32>, vector<16x32xf32> -> vector<16x32xf32>
    %111 = arith.addf %110, %104 : vector<16x32xf32>
    %cst_47 = arith.constant dense<0.000000e+00> : vector<16xf32>
    %112 = vector.multi_reduction <add>, %111, %cst_47 [1] : vector<16x32xf32> to vector<16xf32>
    %113 = vector.shape_cast %112 : vector<16xf32> to vector<16x1xf32>
    %cst_48 = arith.constant 3.200000e+01 : f32
    %114 = vector.broadcast %cst_48 : f32 to vector<16x1xf32>
    %115 = arith.divf %113, %114 : vector<16x1xf32>
    %116 = vector.broadcast %115 : vector<16x1xf32> to vector<16x32xf32>
    %117 = arith.subf %111, %116 : vector<16x32xf32>
    %118 = vector.broadcast %115 : vector<16x1xf32> to vector<16x32xf32>
    %119 = arith.subf %111, %118 : vector<16x32xf32>
    %120 = arith.mulf %117, %119 : vector<16x32xf32>
    %cst_49 = arith.constant dense<0.000000e+00> : vector<16xf32>
    %121 = vector.multi_reduction <add>, %120, %cst_49 [1] : vector<16x32xf32> to vector<16xf32>
    %122 = vector.shape_cast %121 : vector<16xf32> to vector<16x1xf32>
    %cst_50 = arith.constant 3.200000e+01 : f32
    %123 = vector.broadcast %cst_50 : f32 to vector<16x1xf32>
    %124 = arith.divf %122, %123 : vector<16x1xf32>
    %125 = vector.broadcast %115 : vector<16x1xf32> to vector<16x32xf32>
    %126 = arith.subf %111, %125 : vector<16x32xf32>
    %cst_51 = arith.constant 9.99999974E-6 : f32
    %127 = vector.broadcast %cst_51 : f32 to vector<16x1xf32>
    %128 = arith.addf %124, %127 : vector<16x1xf32>
    %129 = math.rsqrt %128 : vector<16x1xf32>
    %130 = vector.broadcast %129 : vector<16x1xf32> to vector<16x32xf32>
    %131 = arith.mulf %126, %130 : vector<16x32xf32>
    %c0_52 = arith.constant 0 : index
    %c0_53 = arith.constant 0 : index
    %132 = vector.load %arg6[%c0_52, %c0_53] : memref<16x32xf32, #tpu.memory_space<vmem>>, vector<16x32xf32>
    tpu.vector_store %arg6[%c0_52, %c0_53], %131 {strides = array<i32>} : memref<16x32xf32, #tpu.memory_space<vmem>>, vector<16x32xf32>,
    return
  }
  func.func @transform_0(%arg0: i32) -> (i32, i32) {
    %c0_i32 = arith.constant 0 : i32
    %c0_i32_0 = arith.constant 0 : i32
    return %arg0, %c0_i32 : i32, i32
  }
  func.func @transform_1(%arg0: i32) -> (i32, i32, i32) {
    %c0_i32 = arith.constant 0 : i32
    %c0_i32_0 = arith.constant 0 : i32
    %c0_i32_1 = arith.constant 0 : i32
    return %arg0, %c0_i32, %c0_i32_0 : i32, i32, i32
  }
  func.func @transform_2(%arg0: i32) -> (i32, i32) {
    %c0_i32 = arith.constant 0 : i32
    %c0_i32_0 = arith.constant 0 : i32
    %c0_i32_1 = arith.constant 0 : i32
    return %c0_i32, %c0_i32_0 : i32, i32
  }
  func.func @transform_3(%arg0: i32) -> (i32, i32) {
    %c0_i32 = arith.constant 0 : i32
    %c0_i32_0 = arith.constant 0 : i32
    %c0_i32_1 = arith.constant 0 : i32
    return %c0_i32, %c0_i32_0 : i32, i32
  }
  func.func @transform_4(%arg0: i32) -> (i32, i32) {
    %c0_i32 = arith.constant 0 : i32
    %c0_i32_0 = arith.constant 0 : i32
    %c0_i32_1 = arith.constant 0 : i32
    return %c0_i32, %c0_i32_0 : i32, i32
  }
  func.func @transform_5(%arg0: i32) -> (i32, i32) {
    %c0_i32 = arith.constant 0 : i32
    %c0_i32_0 = arith.constant 0 : i32
    return %arg0, %c0_i32 : i32, i32
  }
  func.func @transform_6(%arg0: i32) -> (i32, i32) {
    %c0_i32 = arith.constant 0 : i32
    %c0_i32_0 = arith.constant 0 : i32
    return %arg0, %c0_i32 : i32, i32
  }
}

</mosaic_0001>

<llo_original>
// kernel: tpu_custom_call.1
$region0: #{tpu_custom_call.1}
  #allocation0 [shape = 'u32[]', space=smem, size = 0x4, offset = 0x4, fixed_abs, tag = 'smem constant byte address 0x4 - core index']
  #allocation1 [shape = 'u32[144,128]{1,0:T(1,128)}', space=vmem, size = 0x12000, scoped, tag = 'internal scratch']
  %s0 = inlined_call_operand.vmem [shape: f32[16,32], index: 0, kind: input, shape index: {}]
  %s1 = inlined_call_operand.vmem [shape: f32[2,8,8], index: 1, kind: input, shape index: {}]
  %s2 = inlined_call_operand.vmem [shape: f32[32,96], index: 2, kind: input, shape index: {}]
  %s3 = inlined_call_operand.vmem [shape: f32[32,64], index: 3, kind: input, shape index: {}]
  %s4 = inlined_call_operand.vmem [shape: f32[64,32], index: 4, kind: input, shape index: {}]
  %s5 = inlined_call_operand.hbm [shape: f32[16,32], index: 5, kind: output, shape index: {0}]
  %s6 = inlined_call_operand.vmem [shape: f32[32,8], index: 6, kind: output, shape index: {1}]
  %7 = xla_tuple %s5, %s6
  %s8 = sld [smem:[#allocation0]]
  $region38: #{tpu_custom_call.1} parent=0
    _
  %s10 = ssub.s32 1, %s8
  %s11 = scalar_select 0, %s10, %s8
  $region1: #{tpu_custom_call.1} parent=0
    #allocation2 [shape = 'u8[8192]{0}', space=vmem, size = 0x2000, scoped, tag = 'output window, operand 0, single buffered']
    #allocation3 [shape = 's32[1]{0}', space=sflag, size = 0x4, scoped, tag = 'scoped memory for tpu_custom_call.1']
    %12 = vsyncpa [#allocation3], 0
    // Predicated region
    $region2: #{tpu_custom_call.1} parent=1 // pred_check
      _
    $region3: #{tpu_custom_call.1} parent=1 // pred_check_branch
      %14 = sbr.rel (0) target = $region5
    $region4: #{tpu_custom_call.1} parent=1 // pred_region
      _
    $region5: #{tpu_custom_call.1} parent=1 // pred_fallthru
      _
    // Predicated region
    $region6: #{tpu_custom_call.1} parent=1 // pred_check
      _
    $region7: #{tpu_custom_call.1} parent=1 // pred_check_branch
      %16 = sbr.rel (0) target = $region9
    $region8: #{tpu_custom_call.1} parent=1 // pred_region
      _
    $region9: #{tpu_custom_call.1} parent=1 // pred_fallthru
      _
    // Predicated region
    $region10: #{tpu_custom_call.1} parent=1 // pred_check
      _
    $region11: #{tpu_custom_call.1} parent=1 // pred_check_branch
      %18 = sbr.rel (0) target = $region13
    $region12: #{tpu_custom_call.1} parent=1 // pred_region
      _
    $region13: #{tpu_custom_call.1} parent=1 // pred_fallthru
      _
    // Predicated region
    $region14: #{tpu_custom_call.1} parent=1 // pred_check
      _
    $region15: #{tpu_custom_call.1} parent=1 // pred_check_branch
      %20 = sbr.rel (0) target = $region17
    $region16: #{tpu_custom_call.1} parent=1 // pred_region
      _
    $region17: #{tpu_custom_call.1} parent=1 // pred_fallthru
      _
    // Predicated region
    $region18: #{tpu_custom_call.1} parent=1 // pred_check
      _
    $region19: #{tpu_custom_call.1} parent=1 // pred_check_branch
      %22 = sbr.rel (0) target = $region21
    $region20: #{tpu_custom_call.1} parent=1 // pred_region
      _
    $region21: #{tpu_custom_call.1} parent=1 // pred_fallthru
      _
    %v23 = vld [vmem:[%s0] sm:$0xff]
    %v24 = vld [vmem:[%s0 + $0x8] sm:$0xff]
    %v25 = vld [vmem:[%s2] sm:$0xff]
    %v26 = vld [vmem:[%s2 + $0x8] sm:$0xff]
    %v27 = vld [vmem:[%s2 + $0x10] sm:$0xff]
    %v28 = vld [vmem:[%s2 + $0x18] sm:$0xff]
    %vm29 = vcmask 261120
    %v31 = vsel %vm29, %v23, 0
    %v34 = vsel %vm29, %v24, 0
    %36 = vmatprep.subr.mxu0 0.0
    %37 = vmatpush1.msra.mxu0 %v25
    %38 = vmatprep.subr.mxu0 0.0
    %39 = vmatpush1.msra.mxu0 %v26
    %40 = vmatprep.subr.mxu0 0.0
    %41 = vmatpush1.msra.mxu0 %v27
    %42 = vmatprep.subr.mxu0 0.0
    %43 = vmatpush1.msra.mxu0 %v28
    %44 = vmatprep.subr.mxu0 0.0
    %45 = vmatpush1.msra.mxu0 0.0
    %46 = vmatprep.subr.mxu0 0.0
    %47 = vmatpush1.msra.mxu0 0.0
    %48 = vmatprep.subr.mxu0 0.0
    %49 = vmatpush1.msra.mxu0 0.0
    %50 = vmatprep.subr.mxu0 0.0
    %51 = vmatpush1.msra.mxu0 0.0
    %52 = vmatprep.subr.mxu0 0.0
    %53 = vmatpush1.msra.mxu0 0.0
    %54 = vmatprep.subr.mxu0 0.0
    %55 = vmatpush1.msra.mxu0 0.0
    %56 = vmatprep.subr.mxu0 0.0
    %57 = vmatpush1.msra.mxu0 0.0
    %58 = vmatprep.subr.mxu0 0.0
    %59 = vmatpush1.msra.mxu0 0.0
    %60 = vmatprep.subr.mxu0 0.0
    %61 = vmatpush1.msra.mxu0 0.0
    %62 = vmatprep.subr.mxu0 0.0
    %63 = vmatpush1.msra.mxu0 0.0
    %64 = vmatprep.subr.mxu0 0.0
    %65 = vmatpush1.msra.mxu0 0.0
    %66 = vmatprep.subr.mxu0 0.0
    %67 = vmatpush1.msra.mxu0 0.0
    %68 = vmatprep.subr.mxu0 0.0
    %69 = vmatpush1.msra.mxu0 0.0
    %70 = vmatprep.subr.mxu0 0.0
    %71 = vmatpush1.msra.mxu0 0.0
    %72 = vmatprep.subr.mxu0 0.0
    %73 = vmatpush1.msra.mxu0 0.0
    %74 = vmatprep.subr.mxu0 0.0
    %75 = vmatpush1.msra.mxu0 0.0
    %76 = vmatprep.subr.mxu0 0.0
    %77 = vmatpush1.msra.mxu0 0.0
    %78 = vmatprep.subr.mxu0 0.0
    %79 = vmatpush1.msra.mxu0 0.0
    %80 = vmatprep.subr.mxu0 0.0
    %81 = vmatpush1.msra.mxu0 0.0
    %82 = vmatprep.subr.mxu0 0.0
    %83 = vmatpush1.msra.mxu0 0.0
    %84 = vmatprep.subr.mxu0 0.0
    %85 = vmatpush1.msra.mxu0 0.0
    %86 = vmatprep.subr.mxu0 0.0
    %87 = vmatpush1.msra.mxu0 0.0
    %88 = vmatprep.subr.mxu0 0.0
    %89 = vmatpush1.msra.mxu0 0.0
    %90 = vmatprep.subr.mxu0 0.0
    %91 = vmatpush1.msra.mxu0 0.0
    %92 = vmatprep.subr.mxu0 0.0
    %93 = vmatpush1.msra.mxu0 0.0
    %94 = vmatprep.subr.mxu0 0.0
    %95 = vmatpush1.msra.mxu0 0.0
    %96 = vmatprep.subr.mxu0 0.0
    %97 = vmatpush1.msra.mxu0 0.0
    %98 = vmatprep.subr.mxu0 0.0
    %99 = vmatpush1.msra.mxu0 0.0
    %100 = vmatprep.mubr.f32.mxu0 0.0
    %101 = vmatmul.mubr.f32.gmra.mrb[0].mxu0 %v31
    %v102 = vpop.f32.mrb[0].mxu0
    %v103 = vadd.f32 0.0, %v102
    %v104 = vpop.f32.mrb[0].mxu0
    %105 = vmatprep.mubr.f32.mxu0 0.0
    %106 = vmatmul.mubr.f32.gmra.mrb[0].mxu0 %v34
    %v107 = vpop.f32.mrb[0].mxu0
    %v108 = vadd.f32 0.0, %v107
    %v109 = vpop.f32.mrb[0].mxu0
    %110 = vdwg.mxu0
    %v111 = vld [vmem:[%s1] sm:$0xff]
    %vm112 = vcmp.gt.f32.partialorder %v111, 0.5
    %v113 = vsel %vm112, -1e+09, 0.0
    %115 = vrot.lane.b32.xlu0 %v103, 112
    %v116 = vpop.permute.xlu0 %115
    %vm117 = vcmask 64512
    %v118 = vsel %vm117, %v103, 0
    %v120 = vsel %vm117, %v116, 0
    %122 = vmatprep.subr.mxu0 0.0
    %123 = vmatpush1.xpose.msra.mxu0 %v120
    %124 = vmatprep.subr.mxu0 0.0
    %125 = vmatpush1.xpose.msra.mxu0 0.0
    %126 = vmatprep.subr.mxu0 0.0
    %127 = vmatpush1.xpose.msra.mxu0 0.0
    %128 = vmatprep.subr.mxu0 0.0
    %129 = vmatpush1.xpose.msra.mxu0 0.0
    %130 = vmatprep.subr.mxu0 0.0
    %131 = vmatpush1.xpose.msra.mxu0 0.0
    %132 = vmatprep.subr.mxu0 0.0
    %133 = vmatpush1.xpose.msra.mxu0 0.0
    %134 = vmatprep.subr.mxu0 0.0
    %135 = vmatpush1.xpose.msra.mxu0 0.0
    %136 = vmatprep.subr.mxu0 0.0
    %137 = vmatpush1.xpose.msra.mxu0 0.0
    %138 = vmatprep.subr.mxu0 0.0
    %139 = vmatpush1.xpose.msra.mxu0 0.0
    %140 = vmatprep.subr.mxu0 0.0
    %141 = vmatpush1.xpose.msra.mxu0 0.0
    %142 = vmatprep.subr.mxu0 0.0
    %143 = vmatpush1.xpose.msra.mxu0 0.0
    %144 = vmatprep.subr.mxu0 0.0
    %145 = vmatpush1.xpose.msra.mxu0 0.0
    %146 = vmatprep.subr.mxu0 0.0
    %147 = vmatpush1.xpose.msra.mxu0 0.0
    %148 = vmatprep.subr.mxu0 0.0
    %149 = vmatpush1.xpose.msra.mxu0 0.0
    %150 = vmatprep.subr.mxu0 0.0
    %151 = vmatpush1.xpose.msra.mxu0 0.0
    %152 = vmatprep.subr.mxu0 0.0
    %153 = vmatpush1.xpose.msra.mxu0 0.0
    %154 = vmatprep.subr.mxu0 0.0
    %155 = vmatpush1.xpose.msra.mxu0 0.0
    %156 = vmatprep.subr.mxu0 0.0
    %157 = vmatpush1.xpose.msra.mxu0 0.0
    %158 = vmatprep.subr.mxu0 0.0
    %159 = vmatpush1.xpose.msra.mxu0 0.0
    %160 = vmatprep.subr.mxu0 0.0
    %161 = vmatpush1.xpose.msra.mxu0 0.0
    %162 = vmatprep.subr.mxu0 0.0
    %163 = vmatpush1.xpose.msra.mxu0 0.0
    %164 = vmatprep.subr.mxu0 0.0
    %165 = vmatpush1.xpose.msra.mxu0 0.0
    %166 = vmatprep.subr.mxu0 0.0
    %167 = vmatpush1.xpose.msra.mxu0 0.0
    %168 = vmatprep.subr.mxu0 0.0
    %169 = vmatpush1.xpose.msra.mxu0 0.0
    %170 = vmatprep.subr.mxu0 0.0
    %171 = vmatpush1.xpose.msra.mxu0 0.0
    %172 = vmatprep.subr.mxu0 0.0
    %173 = vmatpush1.xpose.msra.mxu0 0.0
    %174 = vmatprep.subr.mxu0 0.0
    %175 = vmatpush1.xpose.msra.mxu0 0.0
    %176 = vmatprep.subr.mxu0 0.0
    %177 = vmatpush1.xpose.msra.mxu0 0.0
    %178 = vmatprep.subr.mxu0 0.0
    %179 = vmatpush1.xpose.msra.mxu0 0.0
    %180 = vmatprep.subr.mxu0 0.0
    %181 = vmatpush1.xpose.msra.mxu0 0.0
    %182 = vmatprep.subr.mxu0 0.0
    %183 = vmatpush1.xpose.msra.mxu0 0.0
    %184 = vmatprep.subr.mxu0 0.0
    %185 = vmatpush1.xpose.msra.mxu0 0.0
    %186 = vmatprep.mubr.f32.mxu0 0.0
    %187 = vmatmul.mubr.f32.gmra.mrb[0].mxu0 %v118
    %v188 = vpop.f32.mrb[0].mxu0
    %v189 = vadd.f32 %v113, %v188
    %v190 = vpop.f32.mrb[0].mxu0
    %191 = vdwg.mxu0
    %v192 = vsel %vm117, %v189, -inf
    %193 = vmax.xlane.f32.xlu0 %v192
    %v194 = vpop.xlane.xlu0 %193
    %v195 = vsub.f32 %v189, %v194
    %v196 = vmul.f32 %v195, 1.442695
    %v197 = vpow.pop %v196
    %v198 = vsel %vm117, %v197, 0.0
    %199 = vadd.xlane.f32.xlu0 %v198
    %v200 = vpop.xlane.xlu0 %199
    %v201 = vrcp.pop %v200
    %v202 = vmul.f32 %v197, %v201
    %203 = vst.msk [vmem:[%s6] sm:$0xff] %vm117, %v202
    %204 = vrot.lane.b32.xlu0 %v103, 120
    %v205 = vpop.permute.xlu0 %204
    %206 = vrot.lane.b32.xlu0 %v103, 104
    %v207 = vpop.permute.xlu0 %206
    %v208 = vsel %vm117, %v205, 0
    %v210 = vsel %vm117, %v207, 0
    %212 = vmatprep.subr.mxu0 0.0
    %213 = vmatpush1.xpose.msra.mxu0 %v210
    %214 = vmatprep.subr.mxu0 0.0
    %215 = vmatpush1.xpose.msra.mxu0 0.0
    %216 = vmatprep.subr.mxu0 0.0
    %217 = vmatpush1.xpose.msra.mxu0 0.0
    %218 = vmatprep.subr.mxu0 0.0
    %219 = vmatpush1.xpose.msra.mxu0 0.0
    %220 = vmatprep.subr.mxu0 0.0
    %221 = vmatpush1.xpose.msra.mxu0 0.0
    %222 = vmatprep.subr.mxu0 0.0
    %223 = vmatpush1.xpose.msra.mxu0 0.0
    %224 = vmatprep.subr.mxu0 0.0
    %225 = vmatpush1.xpose.msra.mxu0 0.0
    %226 = vmatprep.subr.mxu0 0.0
    %227 = vmatpush1.xpose.msra.mxu0 0.0
    %228 = vmatprep.subr.mxu0 0.0
    %229 = vmatpush1.xpose.msra.mxu0 0.0
    %230 = vmatprep.subr.mxu0 0.0
    %231 = vmatpush1.xpose.msra.mxu0 0.0
    %232 = vmatprep.subr.mxu0 0.0
    %233 = vmatpush1.xpose.msra.mxu0 0.0
    %234 = vmatprep.subr.mxu0 0.0
    %235 = vmatpush1.xpose.msra.mxu0 0.0
    %236 = vmatprep.subr.mxu0 0.0
    %237 = vmatpush1.xpose.msra.mxu0 0.0
    %238 = vmatprep.subr.mxu0 0.0
    %239 = vmatpush1.xpose.msra.mxu0 0.0
    %240 = vmatprep.subr.mxu0 0.0
    %241 = vmatpush1.xpose.msra.mxu0 0.0
    %242 = vmatprep.subr.mxu0 0.0
    %243 = vmatpush1.xpose.msra.mxu0 0.0
    %244 = vmatprep.subr.mxu0 0.0
    %245 = vmatpush1.xpose.msra.mxu0 0.0
    %246 = vmatprep.subr.mxu0 0.0
    %247 = vmatpush1.xpose.msra.mxu0 0.0
    %248 = vmatprep.subr.mxu0 0.0
    %249 = vmatpush1.xpose.msra.mxu0 0.0
    %250 = vmatprep.subr.mxu0 0.0
    %251 = vmatpush1.xpose.msra.mxu0 0.0
    %252 = vmatprep.subr.mxu0 0.0
    %253 = vmatpush1.xpose.msra.mxu0 0.0
    %254 = vmatprep.subr.mxu0 0.0
    %255 = vmatpush1.xpose.msra.mxu0 0.0
    %256 = vmatprep.subr.mxu0 0.0
    %257 = vmatpush1.xpose.msra.mxu0 0.0
    %258 = vmatprep.subr.mxu0 0.0
    %259 = vmatpush1.xpose.msra.mxu0 0.0
    %260 = vmatprep.subr.mxu0 0.0
    %261 = vmatpush1.xpose.msra.mxu0 0.0
    %262 = vmatprep.subr.mxu0 0.0
    %263 = vmatpush1.xpose.msra.mxu0 0.0
    %264 = vmatprep.subr.mxu0 0.0
    %265 = vmatpush1.xpose.msra.mxu0 0.0
    %266 = vmatprep.subr.mxu0 0.0
    %267 = vmatpush1.xpose.msra.mxu0 0.0
    %268 = vmatprep.subr.mxu0 0.0
    %269 = vmatpush1.xpose.msra.mxu0 0.0
    %270 = vmatprep.subr.mxu0 0.0
    %271 = vmatpush1.xpose.msra.mxu0 0.0
    %272 = vmatprep.subr.mxu0 0.0
    %273 = vmatpush1.xpose.msra.mxu0 0.0
    %274 = vmatprep.subr.mxu0 0.0
    %275 = vmatpush1.xpose.msra.mxu0 0.0
    %276 = vmatprep.mubr.f32.mxu0 0.0
    %277 = vmatmul.mubr.f32.gmra.mrb[0].mxu0 %v208
    %v278 = vpop.f32.mrb[0].mxu0
    %v279 = vadd.f32 %v113, %v278
    %v280 = vpop.f32.mrb[0].mxu0
    %281 = vdwg.mxu0
    %v282 = vsel %vm117, %v279, -inf
    %283 = vmax.xlane.f32.xlu0 %v282
    %v284 = vpop.xlane.xlu0 %283
    %v285 = vsub.f32 %v279, %v284
    %v286 = vmul.f32 %v285, 1.442695
    %v287 = vpow.pop %v286
    %v288 = vsel %vm117, %v287, 0.0
    %289 = vadd.xlane.f32.xlu0 %v288
    %v290 = vpop.xlane.xlu0 %289
    %v291 = vrcp.pop %v290
    %v292 = vmul.f32 %v287, %v291
    %293 = vst.msk [vmem:[%s6 + $0x8] sm:$0xff] %vm117, %v292
    %294 = vrot.lane.b32.xlu0 %v103, 64
    %v295 = vpop.permute.xlu0 %294
    %v298 = vsel %vm117, %v292, 0
    %300 = vmatprep.subr.mxu0 0.0
    %301 = vmatpush1.msra.mxu0 %v295
    %302 = vmatprep.subr.mxu0 0.0
    %303 = vmatpush1.msra.mxu0 0.0
    %304 = vmatprep.subr.mxu0 0.0
    %305 = vmatpush1.msra.mxu0 0.0
    %306 = vmatprep.subr.mxu0 0.0
    %307 = vmatpush1.msra.mxu0 0.0
    %308 = vmatprep.subr.mxu0 0.0
    %309 = vmatpush1.msra.mxu0 0.0
    %310 = vmatprep.subr.mxu0 0.0
    %311 = vmatpush1.msra.mxu0 0.0
    %312 = vmatprep.subr.mxu0 0.0
    %313 = vmatpush1.msra.mxu0 0.0
    %314 = vmatprep.subr.mxu0 0.0
    %315 = vmatpush1.msra.mxu0 0.0
    %316 = vmatprep.subr.mxu0 0.0
    %317 = vmatpush1.msra.mxu0 0.0
    %318 = vmatprep.subr.mxu0 0.0
    %319 = vmatpush1.msra.mxu0 0.0
    %320 = vmatprep.subr.mxu0 0.0
    %321 = vmatpush1.msra.mxu0 0.0
    %322 = vmatprep.subr.mxu0 0.0
    %323 = vmatpush1.msra.mxu0 0.0
    %324 = vmatprep.subr.mxu0 0.0
    %325 = vmatpush1.msra.mxu0 0.0
    %326 = vmatprep.subr.mxu0 0.0
    %327 = vmatpush1.msra.mxu0 0.0
    %328 = vmatprep.subr.mxu0 0.0
    %329 = vmatpush1.msra.mxu0 0.0
    %330 = vmatprep.subr.mxu0 0.0
    %331 = vmatpush1.msra.mxu0 0.0
    %332 = vmatprep.subr.mxu0 0.0
    %333 = vmatpush1.msra.mxu0 0.0
    %334 = vmatprep.subr.mxu0 0.0
    %335 = vmatpush1.msra.mxu0 0.0
    %336 = vmatprep.subr.mxu0 0.0
    %337 = vmatpush1.msra.mxu0 0.0
    %338 = vmatprep.subr.mxu0 0.0
    %339 = vmatpush1.msra.mxu0 0.0
    %340 = vmatprep.subr.mxu0 0.0
    %341 = vmatpush1.msra.mxu0 0.0
    %342 = vmatprep.subr.mxu0 0.0
    %343 = vmatpush1.msra.mxu0 0.0
    %344 = vmatprep.subr.mxu0 0.0
    %345 = vmatpush1.msra.mxu0 0.0
    %346 = vmatprep.subr.mxu0 0.0
    %347 = vmatpush1.msra.mxu0 0.0
    %348 = vmatprep.subr.mxu0 0.0
    %349 = vmatpush1.msra.mxu0 0.0
    %350 = vmatprep.subr.mxu0 0.0
    %351 = vmatpush1.msra.mxu0 0.0
    %352 = vmatprep.subr.mxu0 0.0
    %353 = vmatpush1.msra.mxu0 0.0
    %354 = vmatprep.subr.mxu0 0.0
    %355 = vmatpush1.msra.mxu0 0.0
    %356 = vmatprep.subr.mxu0 0.0
    %357 = vmatpush1.msra.mxu0 0.0
    %358 = vmatprep.subr.mxu0 0.0
    %359 = vmatpush1.msra.mxu0 0.0
    %360 = vmatprep.subr.mxu0 0.0
    %361 = vmatpush1.msra.mxu0 0.0
    %362 = vmatprep.subr.mxu0 0.0
    %363 = vmatpush1.msra.mxu0 0.0
    %364 = vmatprep.mubr.f32.mxu0 0.0
    %365 = vmatmul.mubr.f32.gmra.mrb[0].mxu0 %v298
    %v366 = vpop.f32.mrb[0].mxu0
    %v367 = vadd.f32 0.0, %v366
    %v368 = vpop.f32.mrb[0].mxu0
    %369 = vdwg.mxu0
    %370 = vrot.lane.b32.xlu0 %v103, 96
    %v371 = vpop.permute.xlu0 %370
    %v374 = vsel %vm117, %v202, 0
    %376 = vmatprep.subr.mxu0 0.0
    %377 = vmatpush1.msra.mxu0 %v371
    %378 = vmatprep.subr.mxu0 0.0
    %379 = vmatpush1.msra.mxu0 0.0
    %380 = vmatprep.subr.mxu0 0.0
    %381 = vmatpush1.msra.mxu0 0.0
    %382 = vmatprep.subr.mxu0 0.0
    %383 = vmatpush1.msra.mxu0 0.0
    %384 = vmatprep.subr.mxu0 0.0
    %385 = vmatpush1.msra.mxu0 0.0
    %386 = vmatprep.subr.mxu0 0.0
    %387 = vmatpush1.msra.mxu0 0.0
    %388 = vmatprep.subr.mxu0 0.0
    %389 = vmatpush1.msra.mxu0 0.0
    %390 = vmatprep.subr.mxu0 0.0
    %391 = vmatpush1.msra.mxu0 0.0
    %392 = vmatprep.subr.mxu0 0.0
    %393 = vmatpush1.msra.mxu0 0.0
    %394 = vmatprep.subr.mxu0 0.0
    %395 = vmatpush1.msra.mxu0 0.0
    %396 = vmatprep.subr.mxu0 0.0
    %397 = vmatpush1.msra.mxu0 0.0
    %398 = vmatprep.subr.mxu0 0.0
    %399 = vmatpush1.msra.mxu0 0.0
    %400 = vmatprep.subr.mxu0 0.0
    %401 = vmatpush1.msra.mxu0 0.0
    %402 = vmatprep.subr.mxu0 0.0
    %403 = vmatpush1.msra.mxu0 0.0
    %404 = vmatprep.subr.mxu0 0.0
    %405 = vmatpush1.msra.mxu0 0.0
    %406 = vmatprep.subr.mxu0 0.0
    %407 = vmatpush1.msra.mxu0 0.0
    %408 = vmatprep.subr.mxu0 0.0
    %409 = vmatpush1.msra.mxu0 0.0
    %410 = vmatprep.subr.mxu0 0.0
    %411 = vmatpush1.msra.mxu0 0.0
    %412 = vmatprep.subr.mxu0 0.0
    %413 = vmatpush1.msra.mxu0 0.0
    %414 = vmatprep.subr.mxu0 0.0
    %415 = vmatpush1.msra.mxu0 0.0
    %416 = vmatprep.subr.mxu0 0.0
    %417 = vmatpush1.msra.mxu0 0.0
    %418 = vmatprep.subr.mxu0 0.0
    %419 = vmatpush1.msra.mxu0 0.0
    %420 = vmatprep.subr.mxu0 0.0
    %421 = vmatpush1.msra.mxu0 0.0
    %422 = vmatprep.subr.mxu0 0.0
    %423 = vmatpush1.msra.mxu0 0.0
    %424 = vmatprep.subr.mxu0 0.0
    %425 = vmatpush1.msra.mxu0 0.0
    %426 = vmatprep.subr.mxu0 0.0
    %427 = vmatpush1.msra.mxu0 0.0
    %428 = vmatprep.subr.mxu0 0.0
    %429 = vmatpush1.msra.mxu0 0.0
    %430 = vmatprep.subr.mxu0 0.0
    %431 = vmatpush1.msra.mxu0 0.0
    %432 = vmatprep.subr.mxu0 0.0
    %433 = vmatpush1.msra.mxu0 0.0
    %434 = vmatprep.subr.mxu0 0.0
    %435 = vmatpush1.msra.mxu0 0.0
    %436 = vmatprep.subr.mxu0 0.0
    %437 = vmatpush1.msra.mxu0 0.0
    %438 = vmatprep.subr.mxu0 0.0
    %439 = vmatpush1.msra.mxu0 0.0
    %440 = vmatprep.mubr.f32.mxu0 0.0
    %441 = vmatmul.mubr.f32.gmra.mrb[0].mxu0 %v374
    %v442 = vpop.f32.mrb[0].mxu0
    %v443 = vadd.f32 %v367, %v442
    %v444 = vpop.f32.mrb[0].mxu0
    %445 = vdwg.mxu0
    %s446 = scalar_lea.vmem %s1, 8
    %v447 = vld [vmem:[%s446] sm:$0xff]
    %vm448 = vcmp.gt.f32.partialorder %v447, 0.5
    %v449 = vsel %vm448, -1e+09, 0.0
    %451 = vrot.lane.b32.xlu0 %v108, 112
    %v452 = vpop.permute.xlu0 %451
    %v453 = vsel %vm117, %v108, 0
    %v455 = vsel %vm117, %v452, 0
    %457 = vmatprep.subr.mxu0 0.0
    %458 = vmatpush1.xpose.msra.mxu0 %v455
    %459 = vmatprep.subr.mxu0 0.0
    %460 = vmatpush1.xpose.msra.mxu0 0.0
    %461 = vmatprep.subr.mxu0 0.0
    %462 = vmatpush1.xpose.msra.mxu0 0.0
    %463 = vmatprep.subr.mxu0 0.0
    %464 = vmatpush1.xpose.msra.mxu0 0.0
    %465 = vmatprep.subr.mxu0 0.0
    %466 = vmatpush1.xpose.msra.mxu0 0.0
    %467 = vmatprep.subr.mxu0 0.0
    %468 = vmatpush1.xpose.msra.mxu0 0.0
    %469 = vmatprep.subr.mxu0 0.0
    %470 = vmatpush1.xpose.msra.mxu0 0.0
    %471 = vmatprep.subr.mxu0 0.0
    %472 = vmatpush1.xpose.msra.mxu0 0.0
    %473 = vmatprep.subr.mxu0 0.0
    %474 = vmatpush1.xpose.msra.mxu0 0.0
    %475 = vmatprep.subr.mxu0 0.0
    %476 = vmatpush1.xpose.msra.mxu0 0.0
    %477 = vmatprep.subr.mxu0 0.0
    %478 = vmatpush1.xpose.msra.mxu0 0.0
    %479 = vmatprep.subr.mxu0 0.0
    %480 = vmatpush1.xpose.msra.mxu0 0.0
    %481 = vmatprep.subr.mxu0 0.0
    %482 = vmatpush1.xpose.msra.mxu0 0.0
    %483 = vmatprep.subr.mxu0 0.0
    %484 = vmatpush1.xpose.msra.mxu0 0.0
    %485 = vmatprep.subr.mxu0 0.0
    %486 = vmatpush1.xpose.msra.mxu0 0.0
    %487 = vmatprep.subr.mxu0 0.0
    %488 = vmatpush1.xpose.msra.mxu0 0.0
    %489 = vmatprep.subr.mxu0 0.0
    %490 = vmatpush1.xpose.msra.mxu0 0.0
    %491 = vmatprep.subr.mxu0 0.0
    %492 = vmatpush1.xpose.msra.mxu0 0.0
    %493 = vmatprep.subr.mxu0 0.0
    %494 = vmatpush1.xpose.msra.mxu0 0.0
    %495 = vmatprep.subr.mxu0 0.0
    %496 = vmatpush1.xpose.msra.mxu0 0.0
    %497 = vmatprep.subr.mxu0 0.0
    %498 = vmatpush1.xpose.msra.mxu0 0.0
    %499 = vmatprep.subr.mxu0 0.0
    %500 = vmatpush1.xpose.msra.mxu0 0.0
    %501 = vmatprep.subr.mxu0 0.0
    %502 = vmatpush1.xpose.msra.mxu0 0.0
    %503 = vmatprep.subr.mxu0 0.0
    %504 = vmatpush1.xpose.msra.mxu0 0.0
    %505 = vmatprep.subr.mxu0 0.0
    %506 = vmatpush1.xpose.msra.mxu0 0.0
    %507 = vmatprep.subr.mxu0 0.0
    %508 = vmatpush1.xpose.msra.mxu0 0.0
    %509 = vmatprep.subr.mxu0 0.0
    %510 = vmatpush1.xpose.msra.mxu0 0.0
    %511 = vmatprep.subr.mxu0 0.0
    %512 = vmatpush1.xpose.msra.mxu0 0.0
    %513 = vmatprep.subr.mxu0 0.0
    %514 = vmatpush1.xpose.msra.mxu0 0.0
    %515 = vmatprep.subr.mxu0 0.0
    %516 = vmatpush1.xpose.msra.mxu0 0.0
    %517 = vmatprep.subr.mxu0 0.0
    %518 = vmatpush1.xpose.msra.mxu0 0.0
    %519 = vmatprep.subr.mxu0 0.0
    %520 = vmatpush1.xpose.msra.mxu0 0.0
    %521 = vmatprep.mubr.f32.mxu0 0.0
    %522 = vmatmul.mubr.f32.gmra.mrb[0].mxu0 %v453
    %v523 = vpop.f32.mrb[0].mxu0
    %v524 = vadd.f32 %v449, %v523
    %v525 = vpop.f32.mrb[0].mxu0
    %526 = vdwg.mxu0
    %v527 = vsel %vm117, %v524, -inf
    %528 = vmax.xlane.f32.xlu0 %v527
    %v529 = vpop.xlane.xlu0 %528
    %v530 = vsub.f32 %v524, %v529
    %v531 = vmul.f32 %v530, 1.442695
    %v532 = vpow.pop %v531
    %v533 = vsel %vm117, %v532, 0.0
    %534 = vadd.xlane.f32.xlu0 %v533
    %v535 = vpop.xlane.xlu0 %534
    %v536 = vrcp.pop %v535
    %v537 = vmul.f32 %v532, %v536
    %538 = vst.msk [vmem:[%s6 + $0x10] sm:$0xff] %vm117, %v537
    %539 = vrot.lane.b32.xlu0 %v108, 120
    %v540 = vpop.permute.xlu0 %539
    %541 = vrot.lane.b32.xlu0 %v108, 104
    %v542 = vpop.permute.xlu0 %541
    %v543 = vsel %vm117, %v540, 0
    %v545 = vsel %vm117, %v542, 0
    %547 = vmatprep.subr.mxu0 0.0
    %548 = vmatpush1.xpose.msra.mxu0 %v545
    %549 = vmatprep.subr.mxu0 0.0
    %550 = vmatpush1.xpose.msra.mxu0 0.0
    %551 = vmatprep.subr.mxu0 0.0
    %552 = vmatpush1.xpose.msra.mxu0 0.0
    %553 = vmatprep.subr.mxu0 0.0
    %554 = vmatpush1.xpose.msra.mxu0 0.0
    %555 = vmatprep.subr.mxu0 0.0
    %556 = vmatpush1.xpose.msra.mxu0 0.0
    %557 = vmatprep.subr.mxu0 0.0
    %558 = vmatpush1.xpose.msra.mxu0 0.0
    %559 = vmatprep.subr.mxu0 0.0
    %560 = vmatpush1.xpose.msra.mxu0 0.0
    %561 = vmatprep.subr.mxu0 0.0
    %562 = vmatpush1.xpose.msra.mxu0 0.0
    %563 = vmatprep.subr.mxu0 0.0
    %564 = vmatpush1.xpose.msra.mxu0 0.0
    %565 = vmatprep.subr.mxu0 0.0
    %566 = vmatpush1.xpose.msra.mxu0 0.0
    %567 = vmatprep.subr.mxu0 0.0
    %568 = vmatpush1.xpose.msra.mxu0 0.0
    %569 = vmatprep.subr.mxu0 0.0
    %570 = vmatpush1.xpose.msra.mxu0 0.0
    %571 = vmatprep.subr.mxu0 0.0
    %572 = vmatpush1.xpose.msra.mxu0 0.0
    %573 = vmatprep.subr.mxu0 0.0
    %574 = vmatpush1.xpose.msra.mxu0 0.0
    %575 = vmatprep.subr.mxu0 0.0
    %576 = vmatpush1.xpose.msra.mxu0 0.0
    %577 = vmatprep.subr.mxu0 0.0
    %578 = vmatpush1.xpose.msra.mxu0 0.0
    %579 = vmatprep.subr.mxu0 0.0
    %580 = vmatpush1.xpose.msra.mxu0 0.0
    %581 = vmatprep.subr.mxu0 0.0
    %582 = vmatpush1.xpose.msra.mxu0 0.0
    %583 = vmatprep.subr.mxu0 0.0
    %584 = vmatpush1.xpose.msra.mxu0 0.0
    %585 = vmatprep.subr.mxu0 0.0
    %586 = vmatpush1.xpose.msra.mxu0 0.0
    %587 = vmatprep.subr.mxu0 0.0
    %588 = vmatpush1.xpose.msra.mxu0 0.0
    %589 = vmatprep.subr.mxu0 0.0
    %590 = vmatpush1.xpose.msra.mxu0 0.0
    %591 = vmatprep.subr.mxu0 0.0
    %592 = vmatpush1.xpose.msra.mxu0 0.0
    %593 = vmatprep.subr.mxu0 0.0
    %594 = vmatpush1.xpose.msra.mxu0 0.0
    %595 = vmatprep.subr.mxu0 0.0
    %596 = vmatpush1.xpose.msra.mxu0 0.0
    %597 = vmatprep.subr.mxu0 0.0
    %598 = vmatpush1.xpose.msra.mxu0 0.0
    %599 = vmatprep.subr.mxu0 0.0
    %600 = vmatpush1.xpose.msra.mxu0 0.0
    %601 = vmatprep.subr.mxu0 0.0
    %602 = vmatpush1.xpose.msra.mxu0 0.0
    %603 = vmatprep.subr.mxu0 0.0
    %604 = vmatpush1.xpose.msra.mxu0 0.0
    %605 = vmatprep.subr.mxu0 0.0
    %606 = vmatpush1.xpose.msra.mxu0 0.0
    %607 = vmatprep.subr.mxu0 0.0
    %608 = vmatpush1.xpose.msra.mxu0 0.0
    %609 = vmatprep.subr.mxu0 0.0
    %610 = vmatpush1.xpose.msra.mxu0 0.0
    %611 = vmatprep.mubr.f32.mxu0 0.0
    %612 = vmatmul.mubr.f32.gmra.mrb[0].mxu0 %v543
    %v613 = vpop.f32.mrb[0].mxu0
    %v614 = vadd.f32 %v449, %v613
    %v615 = vpop.f32.mrb[0].mxu0
    %616 = vdwg.mxu0
    %v617 = vsel %vm117, %v614, -inf
    %618 = vmax.xlane.f32.xlu0 %v617
    %v619 = vpop.xlane.xlu0 %618
    %v620 = vsub.f32 %v614, %v619
    %v621 = vmul.f32 %v620, 1.442695
    %v622 = vpow.pop %v621
    %v623 = vsel %vm117, %v622, 0.0
    %624 = vadd.xlane.f32.xlu0 %v623
    %v625 = vpop.xlane.xlu0 %624
    %v626 = vrcp.pop %v625
    %v627 = vmul.f32 %v622, %v626
    %628 = vst.msk [vmem:[%s6 + $0x18] sm:$0xff] %vm117, %v627
    %629 = vrot.lane.b32.xlu0 %v108, 64
    %v630 = vpop.permute.xlu0 %629
    %v633 = vsel %vm117, %v627, 0
    %635 = vmatprep.subr.mxu0 0.0
    %636 = vmatpush1.msra.mxu0 %v630
    %637 = vmatprep.subr.mxu0 0.0
    %638 = vmatpush1.msra.mxu0 0.0
    %639 = vmatprep.subr.mxu0 0.0
    %640 = vmatpush1.msra.mxu0 0.0
    %641 = vmatprep.subr.mxu0 0.0
    %642 = vmatpush1.msra.mxu0 0.0
    %643 = vmatprep.subr.mxu0 0.0
    %644 = vmatpush1.msra.mxu0 0.0
    %645 = vmatprep.subr.mxu0 0.0
    %646 = vmatpush1.msra.mxu0 0.0
    %647 = vmatprep.subr.mxu0 0.0
    %648 = vmatpush1.msra.mxu0 0.0
    %649 = vmatprep.subr.mxu0 0.0
    %650 = vmatpush1.msra.mxu0 0.0
    %651 = vmatprep.subr.mxu0 0.0
    %652 = vmatpush1.msra.mxu0 0.0
    %653 = vmatprep.subr.mxu0 0.0
    %654 = vmatpush1.msra.mxu0 0.0
    %655 = vmatprep.subr.mxu0 0.0
    %656 = vmatpush1.msra.mxu0 0.0
    %657 = vmatprep.subr.mxu0 0.0
    %658 = vmatpush1.msra.mxu0 0.0
    %659 = vmatprep.subr.mxu0 0.0
    %660 = vmatpush1.msra.mxu0 0.0
    %661 = vmatprep.subr.mxu0 0.0
    %662 = vmatpush1.msra.mxu0 0.0
    %663 = vmatprep.subr.mxu0 0.0
    %664 = vmatpush1.msra.mxu0 0.0
    %665 = vmatprep.subr.mxu0 0.0
    %666 = vmatpush1.msra.mxu0 0.0
    %667 = vmatprep.subr.mxu0 0.0
    %668 = vmatpush1.msra.mxu0 0.0
    %669 = vmatprep.subr.mxu0 0.0
    %670 = vmatpush1.msra.mxu0 0.0
    %671 = vmatprep.subr.mxu0 0.0
    %672 = vmatpush1.msra.mxu0 0.0
    %673 = vmatprep.subr.mxu0 0.0
    %674 = vmatpush1.msra.mxu0 0.0
    %675 = vmatprep.subr.mxu0 0.0
    %676 = vmatpush1.msra.mxu0 0.0
    %677 = vmatprep.subr.mxu0 0.0
    %678 = vmatpush1.msra.mxu0 0.0
    %679 = vmatprep.subr.mxu0 0.0
    %680 = vmatpush1.msra.mxu0 0.0
    %681 = vmatprep.subr.mxu0 0.0
    %682 = vmatpush1.msra.mxu0 0.0
    %683 = vmatprep.subr.mxu0 0.0
    %684 = vmatpush1.msra.mxu0 0.0
    %685 = vmatprep.subr.mxu0 0.0
    %686 = vmatpush1.msra.mxu0 0.0
    %687 = vmatprep.subr.mxu0 0.0
    %688 = vmatpush1.msra.mxu0 0.0
    %689 = vmatprep.subr.mxu0 0.0
    %690 = vmatpush1.msra.mxu0 0.0
    %691 = vmatprep.subr.mxu0 0.0
    %692 = vmatpush1.msra.mxu0 0.0
    %693 = vmatprep.subr.mxu0 0.0
    %694 = vmatpush1.msra.mxu0 0.0
    %695 = vmatprep.subr.mxu0 0.0
    %696 = vmatpush1.msra.mxu0 0.0
    %697 = vmatprep.subr.mxu0 0.0
    %698 = vmatpush1.msra.mxu0 0.0
    %699 = vmatprep.mubr.f32.mxu0 0.0
    %700 = vmatmul.mubr.f32.gmra.mrb[0].mxu0 %v633
    %v701 = vpop.f32.mrb[0].mxu0
    %v702 = vadd.f32 0.0, %v701
    %v703 = vpop.f32.mrb[0].mxu0
    %704 = vdwg.mxu0
    %705 = vrot.lane.b32.xlu0 %v108, 96
    %v706 = vpop.permute.xlu0 %705
    %v709 = vsel %vm117, %v537, 0
    %711 = vmatprep.subr.mxu0 0.0
    %712 = vmatpush1.msra.mxu0 %v706
    %713 = vmatprep.subr.mxu0 0.0
    %714 = vmatpush1.msra.mxu0 0.0
    %715 = vmatprep.subr.mxu0 0.0
    %716 = vmatpush1.msra.mxu0 0.0
    %717 = vmatprep.subr.mxu0 0.0
    %718 = vmatpush1.msra.mxu0 0.0
    %719 = vmatprep.subr.mxu0 0.0
    %720 = vmatpush1.msra.mxu0 0.0
    %721 = vmatprep.subr.mxu0 0.0
    %722 = vmatpush1.msra.mxu0 0.0
    %723 = vmatprep.subr.mxu0 0.0
    %724 = vmatpush1.msra.mxu0 0.0
    %725 = vmatprep.subr.mxu0 0.0
    %726 = vmatpush1.msra.mxu0 0.0
    %727 = vmatprep.subr.mxu0 0.0
    %728 = vmatpush1.msra.mxu0 0.0
    %729 = vmatprep.subr.mxu0 0.0
    %730 = vmatpush1.msra.mxu0 0.0
    %731 = vmatprep.subr.mxu0 0.0
    %732 = vmatpush1.msra.mxu0 0.0
    %733 = vmatprep.subr.mxu0 0.0
    %734 = vmatpush1.msra.mxu0 0.0
    %735 = vmatprep.subr.mxu0 0.0
    %736 = vmatpush1.msra.mxu0 0.0
    %737 = vmatprep.subr.mxu0 0.0
    %738 = vmatpush1.msra.mxu0 0.0
    %739 = vmatprep.subr.mxu0 0.0
    %740 = vmatpush1.msra.mxu0 0.0
    %741 = vmatprep.subr.mxu0 0.0
    %742 = vmatpush1.msra.mxu0 0.0
    %743 = vmatprep.subr.mxu0 0.0
    %744 = vmatpush1.msra.mxu0 0.0
    %745 = vmatprep.subr.mxu0 0.0
    %746 = vmatpush1.msra.mxu0 0.0
    %747 = vmatprep.subr.mxu0 0.0
    %748 = vmatpush1.msra.mxu0 0.0
    %749 = vmatprep.subr.mxu0 0.0
    %750 = vmatpush1.msra.mxu0 0.0
    %751 = vmatprep.subr.mxu0 0.0
    %752 = vmatpush1.msra.mxu0 0.0
    %753 = vmatprep.subr.mxu0 0.0
    %754 = vmatpush1.msra.mxu0 0.0
    %755 = vmatprep.subr.mxu0 0.0
    %756 = vmatpush1.msra.mxu0 0.0
    %757 = vmatprep.subr.mxu0 0.0
    %758 = vmatpush1.msra.mxu0 0.0
    %759 = vmatprep.subr.mxu0 0.0
    %760 = vmatpush1.msra.mxu0 0.0
    %761 = vmatprep.subr.mxu0 0.0
    %762 = vmatpush1.msra.mxu0 0.0
    %763 = vmatprep.subr.mxu0 0.0
    %764 = vmatpush1.msra.mxu0 0.0
    %765 = vmatprep.subr.mxu0 0.0
    %766 = vmatpush1.msra.mxu0 0.0
    %767 = vmatprep.subr.mxu0 0.0
    %768 = vmatpush1.msra.mxu0 0.0
    %769 = vmatprep.subr.mxu0 0.0
    %770 = vmatpush1.msra.mxu0 0.0
    %771 = vmatprep.subr.mxu0 0.0
    %772 = vmatpush1.msra.mxu0 0.0
    %773 = vmatprep.subr.mxu0 0.0
    %774 = vmatpush1.msra.mxu0 0.0
    %775 = vmatprep.mubr.f32.mxu0 0.0
    %776 = vmatmul.mubr.f32.gmra.mrb[0].mxu0 %v709
    %v777 = vpop.f32.mrb[0].mxu0
    %v778 = vadd.f32 %v702, %v777
    %v779 = vpop.f32.mrb[0].mxu0
    %780 = vdwg.mxu0
    %v781 = vadd.f32 %v443, %v23
    %v782 = vadd.f32 %v778, %v24
    %v783 = vsel %vm29, %v781, 0.0
    %784 = vadd.xlane.f32.xlu0 %v783
    %v785 = vpop.xlane.xlu0 %784
    %v786 = vsel %vm29, %v782, 0.0
    %787 = vadd.xlane.f32.xlu0 %v786
    %v788 = vpop.xlane.xlu0 %787
    %v789 = vrcp.pop 32.0
    %v790 = vmul.f32 %v785, %v789
    %v791 = vmul.f32 %v788, %v789
    %v792 = vsub.f32 %v781, %v790
    %v793 = vsub.f32 %v782, %v791
    %v794 = vmul.f32 %v792, %v792
    %v795 = vmul.f32 %v793, %v793
    %v796 = vsel %vm29, %v794, 0.0
    %797 = vadd.xlane.f32.xlu0 %v796
    %v798 = vpop.xlane.xlu0 %797
    %v799 = vsel %vm29, %v795, 0.0
    %800 = vadd.xlane.f32.xlu0 %v799
    %v801 = vpop.xlane.xlu0 %800
    %v802 = vmul.f32 %v798, %v789
    %v803 = vmul.f32 %v801, %v789
    %v804 = vadd.f32 %v802, 1e-05
    %v805 = vadd.f32 %v803, 1e-05
    %v806 = vrsqrt.pop %v804
    %v807 = vrsqrt.pop %v805
    %v808 = vmul.f32 %v792, %v806
    %v809 = vmul.f32 %v793, %v807
    %v810 = vld [vmem:[%s3] sm:$0xff]
    %v811 = vld [vmem:[%s3 + $0x8] sm:$0xff]
    %v812 = vld [vmem:[%s3 + $0x10] sm:$0xff]
    %v813 = vld [vmem:[%s3 + $0x18] sm:$0xff]
    %v815 = vsel %vm29, %v808, 0
    %v818 = vsel %vm29, %v809, 0
    %820 = vmatprep.subr.mxu0 0.0
    %821 = vmatpush1.msra.mxu0 %v810
    %822 = vmatprep.subr.mxu0 0.0
    %823 = vmatpush1.msra.mxu0 %v811
    %824 = vmatprep.subr.mxu0 0.0
    %825 = vmatpush1.msra.mxu0 %v812
    %826 = vmatprep.subr.mxu0 0.0
    %827 = vmatpush1.msra.mxu0 %v813
    %828 = vmatprep.subr.mxu0 0.0
    %829 = vmatpush1.msra.mxu0 0.0
    %830 = vmatprep.subr.mxu0 0.0
    %831 = vmatpush1.msra.mxu0 0.0
    %832 = vmatprep.subr.mxu0 0.0
    %833 = vmatpush1.msra.mxu0 0.0
    %834 = vmatprep.subr.mxu0 0.0
    %835 = vmatpush1.msra.mxu0 0.0
    %836 = vmatprep.subr.mxu0 0.0
    %837 = vmatpush1.msra.mxu0 0.0
    %838 = vmatprep.subr.mxu0 0.0
    %839 = vmatpush1.msra.mxu0 0.0
    %840 = vmatprep.subr.mxu0 0.0
    %841 = vmatpush1.msra.mxu0 0.0
    %842 = vmatprep.subr.mxu0 0.0
    %843 = vmatpush1.msra.mxu0 0.0
    %844 = vmatprep.subr.mxu0 0.0
    %845 = vmatpush1.msra.mxu0 0.0
    %846 = vmatprep.subr.mxu0 0.0
    %847 = vmatpush1.msra.mxu0 0.0
    %848 = vmatprep.subr.mxu0 0.0
    %849 = vmatpush1.msra.mxu0 0.0
    %850 = vmatprep.subr.mxu0 0.0
    %851 = vmatpush1.msra.mxu0 0.0
    %852 = vmatprep.subr.mxu0 0.0
    %853 = vmatpush1.msra.mxu0 0.0
    %854 = vmatprep.subr.mxu0 0.0
    %855 = vmatpush1.msra.mxu0 0.0
    %856 = vmatprep.subr.mxu0 0.0
    %857 = vmatpush1.msra.mxu0 0.0
    %858 = vmatprep.subr.mxu0 0.0
    %859 = vmatpush1.msra.mxu0 0.0
    %860 = vmatprep.subr.mxu0 0.0
    %861 = vmatpush1.msra.mxu0 0.0
    %862 = vmatprep.subr.mxu0 0.0
    %863 = vmatpush1.msra.mxu0 0.0
    %864 = vmatprep.subr.mxu0 0.0
    %865 = vmatpush1.msra.mxu0 0.0
    %866 = vmatprep.subr.mxu0 0.0
    %867 = vmatpush1.msra.mxu0 0.0
    %868 = vmatprep.subr.mxu0 0.0
    %869 = vmatpush1.msra.mxu0 0.0
    %870 = vmatprep.subr.mxu0 0.0
    %871 = vmatpush1.msra.mxu0 0.0
    %872 = vmatprep.subr.mxu0 0.0
    %873 = vmatpush1.msra.mxu0 0.0
    %874 = vmatprep.subr.mxu0 0.0
    %875 = vmatpush1.msra.mxu0 0.0
    %876 = vmatprep.subr.mxu0 0.0
    %877 = vmatpush1.msra.mxu0 0.0
    %878 = vmatprep.subr.mxu0 0.0
    %879 = vmatpush1.msra.mxu0 0.0
    %880 = vmatprep.subr.mxu0 0.0
    %881 = vmatpush1.msra.mxu0 0.0
    %882 = vmatprep.subr.mxu0 0.0
    %883 = vmatpush1.msra.mxu0 0.0
    %884 = vmatprep.mubr.f32.mxu0 0.0
    %885 = vmatmul.mubr.f32.gmra.mrb[0].mxu0 %v815
    %v886 = vpop.f32.mrb[0].mxu0
    %v887 = vadd.f32 0.0, %v886
    %v888 = vpop.f32.mrb[0].mxu0
    %889 = vmatprep.mubr.f32.mxu0 0.0
    %890 = vmatmul.mubr.f32.gmra.mrb[0].mxu0 %v818
    %v891 = vpop.f32.mrb[0].mxu0
    %v892 = vadd.f32 0.0, %v891
    %v893 = vpop.f32.mrb[0].mxu0
    %894 = vdwg.mxu0
    %v895 = vmax.f32 %v887, 0.0
    %v896 = vmax.f32 %v892, 0.0
    %v897 = vld [vmem:[%s4] sm:$0xff]
    %v898 = vld [vmem:[%s4 + $0x8] sm:$0xff]
    %v899 = vld [vmem:[%s4 + $0x10] sm:$0xff]
    %v900 = vld [vmem:[%s4 + $0x18] sm:$0xff]
    %v901 = vld [vmem:[%s4 + $0x20] sm:$0xff]
    %v902 = vld [vmem:[%s4 + $0x28] sm:$0xff]
    %v903 = vld [vmem:[%s4 + $0x30] sm:$0xff]
    %v904 = vld [vmem:[%s4 + $0x38] sm:$0xff]
    %vm905 = vcmask 523264
    %v907 = vsel %vm905, %v895, 0
    %v910 = vsel %vm905, %v896, 0
    %912 = vmatprep.subr.mxu0 0.0
    %913 = vmatpush1.msra.mxu0 %v897
    %914 = vmatprep.subr.mxu0 0.0
    %915 = vmatpush1.msra.mxu0 %v898
    %916 = vmatprep.subr.mxu0 0.0
    %917 = vmatpush1.msra.mxu0 %v899
    %918 = vmatprep.subr.mxu0 0.0
    %919 = vmatpush1.msra.mxu0 %v900
    %920 = vmatprep.subr.mxu0 0.0
    %921 = vmatpush1.msra.mxu0 %v901
    %922 = vmatprep.subr.mxu0 0.0
    %923 = vmatpush1.msra.mxu0 %v902
    %924 = vmatprep.subr.mxu0 0.0
    %925 = vmatpush1.msra.mxu0 %v903
    %926 = vmatprep.subr.mxu0 0.0
    %927 = vmatpush1.msra.mxu0 %v904
    %928 = vmatprep.subr.mxu0 0.0
    %929 = vmatpush1.msra.mxu0 0.0
    %930 = vmatprep.subr.mxu0 0.0
    %931 = vmatpush1.msra.mxu0 0.0
    %932 = vmatprep.subr.mxu0 0.0
    %933 = vmatpush1.msra.mxu0 0.0
    %934 = vmatprep.subr.mxu0 0.0
    %935 = vmatpush1.msra.mxu0 0.0
    %936 = vmatprep.subr.mxu0 0.0
    %937 = vmatpush1.msra.mxu0 0.0
    %938 = vmatprep.subr.mxu0 0.0
    %939 = vmatpush1.msra.mxu0 0.0
    %940 = vmatprep.subr.mxu0 0.0
    %941 = vmatpush1.msra.mxu0 0.0
    %942 = vmatprep.subr.mxu0 0.0
    %943 = vmatpush1.msra.mxu0 0.0
    %944 = vmatprep.subr.mxu0 0.0
    %945 = vmatpush1.msra.mxu0 0.0
    %946 = vmatprep.subr.mxu0 0.0
    %947 = vmatpush1.msra.mxu0 0.0
    %948 = vmatprep.subr.mxu0 0.0
    %949 = vmatpush1.msra.mxu0 0.0
    %950 = vmatprep.subr.mxu0 0.0
    %951 = vmatpush1.msra.mxu0 0.0
    %952 = vmatprep.subr.mxu0 0.0
    %953 = vmatpush1.msra.mxu0 0.0
    %954 = vmatprep.subr.mxu0 0.0
    %955 = vmatpush1.msra.mxu0 0.0
    %956 = vmatprep.subr.mxu0 0.0
    %957 = vmatpush1.msra.mxu0 0.0
    %958 = vmatprep.subr.mxu0 0.0
    %959 = vmatpush1.msra.mxu0 0.0
    %960 = vmatprep.subr.mxu0 0.0
    %961 = vmatpush1.msra.mxu0 0.0
    %962 = vmatprep.subr.mxu0 0.0
    %963 = vmatpush1.msra.mxu0 0.0
    %964 = vmatprep.subr.mxu0 0.0
    %965 = vmatpush1.msra.mxu0 0.0
    %966 = vmatprep.subr.mxu0 0.0
    %967 = vmatpush1.msra.mxu0 0.0
    %968 = vmatprep.subr.mxu0 0.0
    %969 = vmatpush1.msra.mxu0 0.0
    %970 = vmatprep.subr.mxu0 0.0
    %971 = vmatpush1.msra.mxu0 0.0
    %972 = vmatprep.subr.mxu0 0.0
    %973 = vmatpush1.msra.mxu0 0.0
    %974 = vmatprep.subr.mxu0 0.0
    %975 = vmatpush1.msra.mxu0 0.0
    %976 = vmatprep.mubr.f32.mxu0 0.0
    %977 = vmatmul.mubr.f32.gmra.mrb[0].mxu0 %v907
    %v978 = vpop.f32.mrb[0].mxu0
    %v979 = vadd.f32 %v808, %v978
    %v980 = vpop.f32.mrb[0].mxu0
    %981 = vmatprep.mubr.f32.mxu0 0.0
    %982 = vmatmul.mubr.f32.gmra.mrb[0].mxu0 %v910
    %v983 = vpop.f32.mrb[0].mxu0
    %v984 = vadd.f32 %v809, %v983
    %v985 = vpop.f32.mrb[0].mxu0
    %986 = vdwg.mxu0
    %v987 = vsel %vm29, %v979, 0.0
    %988 = vadd.xlane.f32.xlu0 %v987
    %v989 = vpop.xlane.xlu0 %988
    %v990 = vsel %vm29, %v984, 0.0
    %991 = vadd.xlane.f32.xlu0 %v990
    %v992 = vpop.xlane.xlu0 %991
    %v993 = vmul.f32 %v989, %v789
    %v994 = vmul.f32 %v992, %v789
    %v995 = vsub.f32 %v979, %v993
    %v996 = vsub.f32 %v984, %v994
    %v997 = vmul.f32 %v995, %v995
    %v998 = vmul.f32 %v996, %v996
    %v999 = vsel %vm29, %v997, 0.0
    %1000 = vadd.xlane.f32.xlu0 %v999
    %v1001 = vpop.xlane.xlu0 %1000
    %v1002 = vsel %vm29, %v998, 0.0
    %1003 = vadd.xlane.f32.xlu0 %v1002
    %v1004 = vpop.xlane.xlu0 %1003
    %v1005 = vmul.f32 %v1001, %v789
    %v1006 = vmul.f32 %v1004, %v789
    %v1007 = vadd.f32 %v1005, 1e-05
    %v1008 = vadd.f32 %v1006, 1e-05
    %v1009 = vrsqrt.pop %v1007
    %v1010 = vrsqrt.pop %v1008
    %v1011 = vmul.f32 %v995, %v1009
    %v1012 = vmul.f32 %v996, %v1010
    %1013 = vst.msk [vmem:[#allocation2] sm:$0xff] %vm29, %v1011
    %1014 = vst.msk [vmem:[#allocation2 + $0x8] sm:$0xff] %vm29, %v1012
    // Predicated region
    $region22: #{tpu_custom_call.1} parent=1 // pred_check
      _
    $region23: #{tpu_custom_call.1} parent=1 // pred_check_branch
      %1016 = sbr.rel (0) target = $region25
    $region24: #{tpu_custom_call.1} parent=1 // pred_region
      %s1018 = ssub.s32 256, 256
      %1019 = vsyncadd [#allocation3], %s1018
      %s1020 = sshll.u32 [#allocation2], 4
      %s1021 = int_to_ptr.vmem [resolvable:$true] %s1020
      %1026 = dma.vmem_to_hbm [thread:$0]  %s1021, 256, %s5, [#allocation3], 128, 128, 8
    $region25: #{tpu_custom_call.1} parent=1 // pred_fallthru
      _
    // Predicated region
    $region26: #{tpu_custom_call.1} parent=1 // pred_check
      _
    $region27: #{tpu_custom_call.1} parent=1 // pred_check_branch
      %1028 = sbr.rel (0) target = $region29
    $region28: #{tpu_custom_call.1} parent=1 // pred_region
      _
    $region29: #{tpu_custom_call.1} parent=1 // pred_fallthru
      _
    // Predicated region
    $region30: #{tpu_custom_call.1} parent=1 // pred_check
      _
    $region31: #{tpu_custom_call.1} parent=1 // pred_check_branch
      %1030 = sbr.rel (0) target = $region33
    $region32: #{tpu_custom_call.1} parent=1 // pred_region
      %1031 = dma.done [#allocation3], 256
    $region33: #{tpu_custom_call.1} parent=1 // pred_fallthru
      _
    // Predicated region
    $region34: #{tpu_custom_call.1} parent=1 // pred_check
      _
    $region35: #{tpu_custom_call.1} parent=1 // pred_check_branch
      %1033 = sbr.rel (0) target = $region37
    $region36: #{tpu_custom_call.1} parent=1 // pred_region
      _
    $region37: #{tpu_custom_call.1} parent=1 // pred_fallthru
      _
    %1034 = vsyncpa [#allocation3], 1

</llo_original>
